<compile_context>
chip_gen: v7x
topology: tpu7x:2x2x1
jax: 0.10.0
libtpu: 0.0.40
codegen_flags: <defaults>
</compile_context>

<pallas_src>
import functools

import jax
import jax.numpy as jnp
from jax import lax
from jax.experimental import pallas as pl
from jax.experimental.pallas import tpu as pltpu


def _down_block_kernel(x_ref, r_ref, shift_ref, mtop_ref, mbot_ref, alpha_ref,
                       o_ref, *, wc):
    """Fused maxpool(2,2) + conv3x3(pad=1) + folded-BN + PReLU for a block of images
    stacked along the sublane (row) axis.

    x_ref:     (M, 4*wc) bf16   M = B_TILE*hp pooled rows; lanes ordered
                                [row_parity(2), col_parity(2), wp, cin]
    r_ref:     (3*wc, wp*cout) bf16  width-unrolled conv weights (BN scale folded),
                                K blocks ordered by vertical tap dy = 0, 1, 2
    shift_ref: (1, wp*cout) f32 folded BN shift, tiled over output columns
    mtop_ref:  (M, 1) f32       0.0 on the top row of each image, else 1.0
    mbot_ref:  (M, 1) f32       0.0 on the bottom row of each image, else 1.0
    alpha_ref: (1,)  f32 (SMEM) PReLU slope (single shared parameter)
    o_ref:     (M, wp*cout) f32
    """
    x = x_ref[...]                                       # (M, 4*wc) bf16
    # ---- 2x2 max-pool: vertical (row-parity) then horizontal (col-parity) max,
    #      each a single max of two contiguous lane halves, all in bf16.
    v = jnp.maximum(x[:, : 2 * wc], x[:, 2 * wc:])       # (M, 2*wc)
    p = jnp.maximum(v[:, :wc], v[:, wc:])                # (M, wc)  pooled map

    # ---- 3x3 conv as three accumulating MXU matmuls (one per vertical tap).
    #      Horizontal taps & padding live in the Toeplitz structure of r_ref.
    r = r_ref[...]                                       # (3*wc, nout) bf16
    c0 = jnp.dot(p, r[:wc, :], preferred_element_type=jnp.float32)          # dy = 0
    c1 = jnp.dot(p, r[wc: 2 * wc, :], preferred_element_type=jnp.float32)   # dy = 1
    c2 = jnp.dot(p, r[2 * wc:, :], preferred_element_type=jnp.float32)      # dy = 2

    # ---- vertical padding: output row i needs c0[i-1] and c2[i+1]; shift the f32
    #      tap results by one row and zero the per-image boundary rows (masks).
    nout = c1.shape[1]
    zrow = jnp.zeros((1, nout), jnp.float32)
    up = jnp.concatenate([zrow, c0[:-1, :]], axis=0) * mtop_ref[...]
    dn = jnp.concatenate([c2[1:, :], zrow], axis=0) * mbot_ref[...]

    # ---- folded BatchNorm shift + PReLU, one lane-dense store.
    y = c1 + up + dn + shift_ref[...]
    y = jnp.where(y > 0, y, y * alpha_ref[0])
    o_ref[...] = y.astype(o_ref.dtype)


def down_block_forward(x_nchw, w_oihw, gamma, beta, run_mean, run_var,
                       prelu_alpha, eps=1e-5):
    n, cin, h, w = x_nchw.shape
    cout = w_oihw.shape[0]
    hp, wp = h // 2, w // 2
    wc = wp * cin
    nout = wp * cout

    # ---- batch tiling: stack B_TILE images per grid step so M = B_TILE*hp rows
    #      (~256 rows fills v6e/v7x's MXU; v5e only needs 128). Pad batch if needed.
    bt = max(1, min(n, -(-256 // hp)))
    while bt < n and (bt * hp) % 8 != 0:     # sublane-aligned row block if grid > 1
        bt += 1
    n_pad = -(-n // bt) * bt
    num_tiles = n_pad // bt

    # ---- layout plumbing (one-time HBM transpose): NCHW -> NHWC -> split H, W into
    #      (pooled index, parity), both parities on lanes, images stacked on rows.
    x_nhwc = jnp.transpose(x_nchw, (0, 2, 3, 1)).astype(jnp.bfloat16)   # (n,H,W,C)
    x_blk = x_nhwc.reshape(n, hp, 2, wp, 2, cin).transpose(0, 1, 2, 4, 3, 5)
    x2d = x_blk.reshape(n * hp, 4 * wc)
    if n_pad > n:
        x2d = jnp.pad(x2d, ((0, (n_pad - n) * hp), (0, 0)))

    # ---- folded eval-mode BatchNorm: scale folded into conv weights (in f32 before
    #      the bf16 cast); shift applied once in the kernel epilogue.
    scale = (gamma / jnp.sqrt(run_var + eps)).astype(jnp.float32)       # (cout,)
    shift = (beta - run_mean * scale).astype(jnp.float32)
    shift_t = jnp.tile(shift.reshape(1, cout), (1, wp))                 # (1, nout)

    # ---- width-unrolled ("Toeplitz") conv weights with horizontal padding folded in:
    #      R[(dy*wp + wi)*cin + c, wo*cout + o] = scale[o] * W[o,c,dy,wi-wo+1], |wi-wo|<=1
    # TODO(synk): Toeplitz RHS duplicates weights O(wp); for large wp / cout switch to
    #             dense per-tap matmuls (K = 9*cin, N = cout) with width tiling, and
    #             tile R columns in multiples of 256 for v6e/v7x.
    whwio = jnp.transpose(w_oihw, (2, 3, 1, 0)).astype(jnp.float32)     # (3,3,cin,cout)
    whwio = whwio * scale[None, None, None, :]
    dxs = jnp.arange(wp)[:, None] - jnp.arange(wp)[None, :] + 1         # (wi, wo)
    valid = (dxs >= 0) & (dxs <= 2)
    r = whwio[:, jnp.clip(dxs, 0, 2)]                                   # (3,wp,wp,cin,cout)
    r = jnp.where(valid[None, :, :, None, None], r, 0.0)
    r = jnp.transpose(r, (0, 1, 3, 2, 4)).reshape(3 * wc, nout).astype(jnp.bfloat16)

    # ---- per-image vertical-boundary masks (precomputed; avoids in-kernel int mod).
    row_in_img = jnp.arange(bt * hp, dtype=jnp.int32) % hp
    mask_top = (row_in_img != 0).astype(jnp.float32).reshape(bt * hp, 1)
    mask_bot = (row_in_img != hp - 1).astype(jnp.float32).reshape(bt * hp, 1)

    # TODO(synk): nn.PReLU() single shared slope only; channel-wise PReLU needs a
    #             lane-tiled (1, nout) alpha vector instead of an SMEM scalar.
    alpha = jnp.asarray(prelu_alpha, jnp.float32).reshape(1)

    kernel = functools.partial(_down_block_kernel, wc=wc)
    out2d = pl.pallas_call(
        kernel,
        out_shape=jax.ShapeDtypeStruct((n_pad * hp, nout), jnp.float32),
        grid=(num_tiles,),
        in_specs=[
            pl.BlockSpec((bt * hp, 4 * wc), lambda i: (i, 0)),
            pl.BlockSpec((3 * wc, nout), lambda i: (0, 0)),
            pl.BlockSpec((1, nout), lambda i: (0, 0)),
            pl.BlockSpec((bt * hp, 1), lambda i: (0, 0)),
            pl.BlockSpec((bt * hp, 1), lambda i: (0, 0)),
            pl.BlockSpec(memory_space=pltpu.MemorySpace.SMEM),
        ],
        out_specs=pl.BlockSpec((bt * hp, nout), lambda i: (i, 0)),
        compiler_params=pltpu.CompilerParams(
            dimension_semantics=("parallel",),
            # TODO(synk): for production images re-derive tiles against v7x's 64 MiB
            #             VMEM and add a second parallel grid axis (row / output-column
            #             tiles) so both v7x TensorCores stay busy at small batch.
            vmem_limit_bytes=32 * 1024 * 1024,
        ),
    )(x2d, r, shift_t, mask_top, mask_bot, alpha)

    # (n_pad*hp, wp*cout) -> (n, cout, hp, wp): pure layout plumbing.
    # TODO(synk): emit bf16 here (halves HBM writeback) if the downstream block accepts it.
    out = out2d.reshape(n_pad, hp, wp, cout)[:n]
    return jnp.transpose(out, (0, 3, 1, 2))


if __name__ == "__main__":
    key = jax.random.PRNGKey(0)
    k1, k2, k3, k4, k5, k6 = jax.random.split(key, 6)

    N, CIN, COUT, H, W = 2, 8, 16, 16, 16
    x = jax.random.normal(k1, (N, CIN, H, W), jnp.float32)
    wgt = jax.random.normal(k2, (COUT, CIN, 3, 3), jnp.float32) * 0.1
    gamma = 1.0 + 0.1 * jax.random.normal(k3, (COUT,), jnp.float32)
    beta = 0.1 * jax.random.normal(k4, (COUT,), jnp.float32)
    run_mean = 0.1 * jax.random.normal(k5, (COUT,), jnp.float32)
    run_var = jnp.abs(1.0 + 0.1 * jax.random.normal(k6, (COUT,), jnp.float32))
    alpha = 0.25   # nn.PReLU() default single-parameter init

    out = jax.jit(down_block_forward)(x, wgt, gamma, beta, run_mean, run_var, alpha)
    out = jax.block_until_ready(out)

    # ---- pure-JAX f32 reference (eval-mode BN) ----
    pooled = lax.reduce_window(x, -jnp.inf, lax.max,
                               (1, 1, 2, 2), (1, 1, 2, 2), "VALID")
    conv = lax.conv_general_dilated(pooled, wgt, (1, 1), ((1, 1), (1, 1)),
                                    dimension_numbers=("NCHW", "OIHW", "NCHW"),
                                    precision=lax.Precision.HIGHEST)
    s = (gamma / jnp.sqrt(run_var + 1e-5))[None, :, None, None]
    b = (beta - run_mean * gamma / jnp.sqrt(run_var + 1e-5))[None, :, None, None]
    bn = conv * s + b
    ref = jnp.where(bn > 0, bn, alpha * bn)

    assert out.shape == ref.shape, (out.shape, ref.shape)
    # bf16 MXU operands vs f32 HIGHEST-precision reference -> loosened tolerance.
    assert jnp.allclose(out, ref, atol=5e-2, rtol=5e-2), \
        float(jnp.max(jnp.abs(out - ref)))
    print("KERNEL_OK")
</pallas_src>

<mosaic_0001>
module attributes {stable_mosaic.version = 11 : i64} {
  func.func @_down_block_kernel(%arg0: i32, %arg1: memref<16x256xbf16, #tpu.memory_space<vmem>>, %arg2: memref<192x128xbf16, #tpu.memory_space<vmem>>, %arg3: memref<1x128xf32, #tpu.memory_space<vmem>>, %arg4: memref<16x1xf32, #tpu.memory_space<vmem>>, %arg5: memref<16x1xf32, #tpu.memory_space<vmem>>, %arg6: memref<1xf32, #tpu.memory_space<smem>>, %arg7: memref<16x128xf32, #tpu.memory_space<vmem>>) attributes {dimension_semantics = [#tpu.dimension_semantics<parallel>], iteration_bounds = array<i64: 1>, scalar_prefetch = 0 : i64, scratch_operands = 0 : i64, tpu.core_type = #tpu.core_type<tc>, window_params = [{transform_indices = @transform_0, window_bounds = array<i64: 16, 256>}, {pipeline_mode = #tpu.pipeline_mode<synchronous>, transform_indices = @transform_1, window_bounds = array<i64: 192, 128>}, {pipeline_mode = #tpu.pipeline_mode<synchronous>, transform_indices = @transform_2, window_bounds = array<i64: 1, 128>}, {pipeline_mode = #tpu.pipeline_mode<synchronous>, transform_indices = @transform_3, window_bounds = array<i64: 16, 1>}, {pipeline_mode = #tpu.pipeline_mode<synchronous>, transform_indices = @transform_4, window_bounds = array<i64: 16, 1>}, {transform_indices = @transform_5, window_bounds = array<i64: 1>}, {transform_indices = @transform_6, window_bounds = array<i64: 16, 128>}]} {
    %c0 = arith.constant 0 : index
    %c0_0 = arith.constant 0 : index
    %0 = vector.load %arg1[%c0, %c0_0] : memref<16x256xbf16, #tpu.memory_space<vmem>>, vector<16x256xbf16>
    %1 = vector.extract_strided_slice %0 {offsets = [0, 0], sizes = [16, 128], strides = [1, 1]} : vector<16x256xbf16> to vector<16x128xbf16>
    %2 = vector.extract_strided_slice %0 {offsets = [0, 128], sizes = [16, 128], strides = [1, 1]} : vector<16x256xbf16> to vector<16x128xbf16>
    %3 = arith.maximumf %1, %2 : vector<16x128xbf16>
    %4 = vector.extract_strided_slice %3 {offsets = [0, 0], sizes = [16, 64], strides = [1, 1]} : vector<16x128xbf16> to vector<16x64xbf16>
    %5 = vector.extract_strided_slice %3 {offsets = [0, 64], sizes = [16, 64], strides = [1, 1]} : vector<16x128xbf16> to vector<16x64xbf16>
    %6 = arith.maximumf %4, %5 : vector<16x64xbf16>
    %c0_1 = arith.constant 0 : index
    %c0_2 = arith.constant 0 : index
    %7 = vector.load %arg2[%c0_1, %c0_2] : memref<192x128xbf16, #tpu.memory_space<vmem>>, vector<192x128xbf16>
    %8 = vector.extract_strided_slice %7 {offsets = [0, 0], sizes = [64, 128], strides = [1, 1]} : vector<192x128xbf16> to vector<64x128xbf16>
    %cst = arith.constant dense<0.000000e+00> : vector<16x128xf32>
    %9 = tpu.matmul %6, %8, %cst {dimension_numbers = #tpu.dot_dimension_numbers<[1], [0], [0], [1], [0, 0, 1, 1], [], []>} : vector<16x64xbf16>, vector<64x128xbf16>, vector<16x128xf32> -> vector<16x128xf32>
    %10 = vector.extract_strided_slice %7 {offsets = [64, 0], sizes = [64, 128], strides = [1, 1]} : vector<192x128xbf16> to vector<64x128xbf16>
    %cst_3 = arith.constant dense<0.000000e+00> : vector<16x128xf32>
    %11 = tpu.matmul %6, %10, %cst_3 {dimension_numbers = #tpu.dot_dimension_numbers<[1], [0], [0], [1], [0, 0, 1, 1], [], []>} : vector<16x64xbf16>, vector<64x128xbf16>, vector<16x128xf32> -> vector<16x128xf32>
    %12 = vector.extract_strided_slice %7 {offsets = [128, 0], sizes = [64, 128], strides = [1, 1]} : vector<192x128xbf16> to vector<64x128xbf16>
    %cst_4 = arith.constant dense<0.000000e+00> : vector<16x128xf32>
    %13 = tpu.matmul %6, %12, %cst_4 {dimension_numbers = #tpu.dot_dimension_numbers<[1], [0], [0], [1], [0, 0, 1, 1], [], []>} : vector<16x64xbf16>, vector<64x128xbf16>, vector<16x128xf32> -> vector<16x128xf32>
    %cst_5 = arith.constant 0.000000e+00 : f32
    %14 = vector.broadcast %cst_5 : f32 to vector<1x128xf32>
    %15 = vector.extract_strided_slice %9 {offsets = [0, 0], sizes = [15, 128], strides = [1, 1]} : vector<16x128xf32> to vector<15x128xf32>
    %16 = tpu.concatenate %14, %15 in 0 : vector<1x128xf32>, vector<15x128xf32> -> vector<16x128xf32>
    %c0_6 = arith.constant 0 : index
    %c0_7 = arith.constant 0 : index
    %17 = vector.load %arg4[%c0_6, %c0_7] : memref<16x1xf32, #tpu.memory_space<vmem>>, vector<16x1xf32>
    %18 = vector.broadcast %17 : vector<16x1xf32> to vector<16x128xf32>
    %19 = arith.mulf %16, %18 : vector<16x128xf32>
    %20 = vector.extract_strided_slice %13 {offsets = [1, 0], sizes = [15, 128], strides = [1, 1]} : vector<16x128xf32> to vector<15x128xf32>
    %21 = tpu.concatenate %20, %14 in 0 : vector<15x128xf32>, vector<1x128xf32> -> vector<16x128xf32>
    %c0_8 = arith.constant 0 : index
    %c0_9 = arith.constant 0 : index
    %22 = vector.load %arg5[%c0_8, %c0_9] : memref<16x1xf32, #tpu.memory_space<vmem>>, vector<16x1xf32>
    %23 = vector.broadcast %22 : vector<16x1xf32> to vector<16x128xf32>
    %24 = arith.mulf %21, %23 : vector<16x128xf32>
    %25 = arith.addf %11, %19 : vector<16x128xf32>
    %26 = arith.addf %25, %24 : vector<16x128xf32>
    %c0_10 = arith.constant 0 : index
    %c0_11 = arith.constant 0 : index
    %27 = vector.load %arg3[%c0_10, %c0_11] : memref<1x128xf32, #tpu.memory_space<vmem>>, vector<1x128xf32>
    %28 = vector.broadcast %27 : vector<1x128xf32> to vector<16x128xf32>
    %29 = arith.addf %26, %28 : vector<16x128xf32>
    %cst_12 = arith.constant 0.000000e+00 : f32
    %30 = vector.broadcast %cst_12 : f32 to vector<16x128xf32>
    %31 = arith.cmpf ogt, %29, %30 : vector<16x128xf32>
    %c0_13 = arith.constant 0 : index
    %32 = memref.load %arg6[%c0_13] : memref<1xf32, #tpu.memory_space<smem>>
    %33 = vector.broadcast %32 : f32 to vector<16x128xf32>
    %34 = arith.mulf %29, %33 : vector<16x128xf32>
    %35 = arith.select %31, %29, %34 : vector<16x128xi1>, vector<16x128xf32>
    %c0_14 = arith.constant 0 : index
    %c0_15 = arith.constant 0 : index
    %36 = vector.load %arg7[%c0_14, %c0_15] : memref<16x128xf32, #tpu.memory_space<vmem>>, vector<16x128xf32>
    tpu.vector_store %arg7[%c0_14, %c0_15], %35 {strides = array<i32>} : memref<16x128xf32, #tpu.memory_space<vmem>>, vector<16x128xf32>,
    return
  }
  func.func @transform_0(%arg0: i32) -> (i32, i32) {
    %c0_i32 = arith.constant 0 : i32
    %c0_i32_0 = arith.constant 0 : i32
    return %arg0, %c0_i32 : i32, i32
  }
  func.func @transform_1(%arg0: i32) -> (i32, i32) {
    %c0_i32 = arith.constant 0 : i32
    %c0_i32_0 = arith.constant 0 : i32
    %c0_i32_1 = arith.constant 0 : i32
    return %c0_i32, %c0_i32_0 : i32, i32
  }
  func.func @transform_2(%arg0: i32) -> (i32, i32) {
    %c0_i32 = arith.constant 0 : i32
    %c0_i32_0 = arith.constant 0 : i32
    %c0_i32_1 = arith.constant 0 : i32
    return %c0_i32, %c0_i32_0 : i32, i32
  }
  func.func @transform_3(%arg0: i32) -> (i32, i32) {
    %c0_i32 = arith.constant 0 : i32
    %c0_i32_0 = arith.constant 0 : i32
    %c0_i32_1 = arith.constant 0 : i32
    return %c0_i32, %c0_i32_0 : i32, i32
  }
  func.func @transform_4(%arg0: i32) -> (i32, i32) {
    %c0_i32 = arith.constant 0 : i32
    %c0_i32_0 = arith.constant 0 : i32
    %c0_i32_1 = arith.constant 0 : i32
    return %c0_i32, %c0_i32_0 : i32, i32
  }
  func.func @transform_5(%arg0: i32) -> i32 {
    %c0_i32 = arith.constant 0 : i32
    %c0_i32_0 = arith.constant 0 : i32
    return %c0_i32 : i32
  }
  func.func @transform_6(%arg0: i32) -> (i32, i32) {
    %c0_i32 = arith.constant 0 : i32
    %c0_i32_0 = arith.constant 0 : i32
    return %arg0, %c0_i32 : i32, i32
  }
}

</mosaic_0001>

<llo_original>
// kernel: down_block_forward.1
$region0: #{down_block_forward.1}
  #allocation0 [shape = 'u32[]', space=smem, size = 0x4, offset = 0x4, fixed_abs, tag = 'smem constant byte address 0x4 - core index']
  #allocation1 [shape = 'u32[144,128]{1,0:T(1,128)}', space=vmem, size = 0x12000, scoped, tag = 'internal scratch']
  #allocation2 [shape = 'f32[1]{0:T(128)S(6)}', space=smem, size = 0x200, scoped, tag = 'scoped memory for down_block_forward.1']
  %s0 = inlined_call_operand.vmem [shape: bf16[16,256], index: 0, kind: input, shape index: {}]
  %s1 = inlined_call_operand.vmem [shape: bf16[192,128], index: 1, kind: input, shape index: {}]
  %s2 = inlined_call_operand.vmem [shape: f32[1,128], index: 2, kind: input, shape index: {}]
  %s3 = inlined_call_operand.vmem [shape: f32[16,1], index: 3, kind: input, shape index: {}]
  %s4 = inlined_call_operand.vmem [shape: f32[16,1], index: 4, kind: input, shape index: {}]
  %s5 = inlined_call_operand.<no memory space> [shape: f32[1], index: 5, kind: input, shape index: {}]
  %s6 = inlined_call_operand.vmem [shape: f32[16,128], index: 6, kind: output, shape index: {}]
  %s7 = sld [smem:[#allocation0]]
  $region34: #{down_block_forward.1} parent=0
    _
  %s9 = ssub.s32 1, %s7
  %s10 = scalar_select 0, %s9, %s7
  %11 = sst [smem:[#allocation2]] %s5
  // Predicated region
  $region2: #{down_block_forward.1} parent=0 // pred_check
    _
  $region3: #{down_block_forward.1} parent=0 // pred_check_branch
    %13 = sbr.rel (0) target = $region5
  $region4: #{down_block_forward.1} parent=0 // pred_region
    _
  $region5: #{down_block_forward.1} parent=0 // pred_fallthru
    _
  // Predicated region
  $region6: #{down_block_forward.1} parent=0 // pred_check
    _
  $region7: #{down_block_forward.1} parent=0 // pred_check_branch
    %15 = sbr.rel (0) target = $region9
  $region8: #{down_block_forward.1} parent=0 // pred_region
    _
  $region9: #{down_block_forward.1} parent=0 // pred_fallthru
    _
  // Predicated region
  $region10: #{down_block_forward.1} parent=0 // pred_check
    _
  $region11: #{down_block_forward.1} parent=0 // pred_check_branch
    %17 = sbr.rel (0) target = $region13
  $region12: #{down_block_forward.1} parent=0 // pred_region
    _
  $region13: #{down_block_forward.1} parent=0 // pred_fallthru
    _
  // Predicated region
  $region14: #{down_block_forward.1} parent=0 // pred_check
    _
  $region15: #{down_block_forward.1} parent=0 // pred_check_branch
    %19 = sbr.rel (0) target = $region17
  $region16: #{down_block_forward.1} parent=0 // pred_region
    _
  $region17: #{down_block_forward.1} parent=0 // pred_fallthru
    _
  // Predicated region
  $region18: #{down_block_forward.1} parent=0 // pred_check
    _
  $region19: #{down_block_forward.1} parent=0 // pred_check_branch
    %21 = sbr.rel (0) target = $region21
  $region20: #{down_block_forward.1} parent=0 // pred_region
    _
  $region21: #{down_block_forward.1} parent=0 // pred_fallthru
    _
  // Predicated region
  $region22: #{down_block_forward.1} parent=0 // pred_check
    _
  $region23: #{down_block_forward.1} parent=0 // pred_check_branch
    %23 = sbr.rel (0) target = $region25
  $region24: #{down_block_forward.1} parent=0 // pred_region
    _
  $region25: #{down_block_forward.1} parent=0 // pred_fallthru
    _
  %v25 = vld [vmem:[%s0] sm:$0xff]
  %v26 = vld [vmem:[%s0 + $0x8] sm:$0xff]
  %v29 = vrot.slane %v25, 4
  %v30 = vrot.slane %v26, 4
  %v33 = vmax.bf16 %v25, %v29
  %v34 = vmax.bf16 %v26, %v30
  %37 = vrot.lane.b32.xlu0 %v33, 64
  %v38 = vpop.permute.xlu0 %37
  %39 = vrot.lane.b32.xlu0 %v34, 64
  %v40 = vpop.permute.xlu0 %39
  %v43 = vmax.bf16 %v33, %v38
  %v44 = vmax.bf16 %v34, %v40
  %v45 = vld [vmem:[%s1] sm:$0xf]
  %v46 = vld [vmem:[%s1 + $0x4] sm:$0xf]
  %v47 = vld [vmem:[%s1 + $0x8] sm:$0xf]
  %v48 = vld [vmem:[%s1 + $0xc] sm:$0xf]
  %v49 = vld [vmem:[%s1 + $0x10] sm:$0xf]
  %v50 = vld [vmem:[%s1 + $0x14] sm:$0xf]
  %v51 = vld [vmem:[%s1 + $0x18] sm:$0xf]
  %v52 = vld [vmem:[%s1 + $0x1c] sm:$0xf]
  %v53 = vld [vmem:[%s1 + $0x20] sm:$0xf]
  %v54 = vld [vmem:[%s1 + $0x24] sm:$0xf]
  %v55 = vld [vmem:[%s1 + $0x28] sm:$0xf]
  %v56 = vld [vmem:[%s1 + $0x2c] sm:$0xf]
  %v57 = vld [vmem:[%s1 + $0x30] sm:$0xf]
  %v58 = vld [vmem:[%s1 + $0x34] sm:$0xf]
  %v59 = vld [vmem:[%s1 + $0x38] sm:$0xf]
  %v60 = vld [vmem:[%s1 + $0x3c] sm:$0xf]
  %v61 = vld [vmem:[%s1 + $0x40] sm:$0xf]
  %v62 = vld [vmem:[%s1 + $0x44] sm:$0xf]
  %v63 = vld [vmem:[%s1 + $0x48] sm:$0xf]
  %v64 = vld [vmem:[%s1 + $0x4c] sm:$0xf]
  %v65 = vld [vmem:[%s1 + $0x50] sm:$0xf]
  %v66 = vld [vmem:[%s1 + $0x54] sm:$0xf]
  %v67 = vld [vmem:[%s1 + $0x58] sm:$0xf]
  %v68 = vld [vmem:[%s1 + $0x5c] sm:$0xf]
  %v71 = vunpack.c.l.b16 %v43
  %v72 = vunpack.c.l.b16 %v44
  %v73 = vpack.c.b16 %v72, %v71
  %v82 = vunpack.c.l.b16 %v45
  %v83 = vunpack.c.l.b16 %v46
  %v84 = vunpack.c.l.b16 %v47
  %v85 = vunpack.c.l.b16 %v48
  %v86 = vunpack.c.l.b16 %v49
  %v87 = vunpack.c.l.b16 %v50
  %v88 = vunpack.c.l.b16 %v51
  %v89 = vunpack.c.l.b16 %v52
  %v90 = vpack.c.b16 %v83, %v82
  %v91 = vpack.c.b16 %v85, %v84
  %v92 = vpack.c.b16 %v87, %v86
  %v93 = vpack.c.b16 %v89, %v88
  %vm98 = vcmask 523264
  %v100 = vsel %vm98, %v73, 0
  %102 = vmatprep.subr.bf16.mxu0 0
  %103 = vmatpush1.bf16.msra.mxu0 %v90
  %104 = vmatprep.subr.bf16.mxu0 0
  %105 = vmatpush1.bf16.msra.mxu0 %v91
  %106 = vmatprep.subr.bf16.mxu0 0
  %107 = vmatpush1.bf16.msra.mxu0 %v92
  %108 = vmatprep.subr.bf16.mxu0 0
  %109 = vmatpush1.bf16.msra.mxu0 %v93
  %110 = vmatprep.subr.bf16.mxu0 0
  %111 = vmatpush1.bf16.msra.mxu0 0
  %112 = vmatprep.subr.bf16.mxu0 0
  %113 = vmatpush1.bf16.msra.mxu0 0
  %114 = vmatprep.subr.bf16.mxu0 0
  %115 = vmatpush1.bf16.msra.mxu0 0
  %116 = vmatprep.subr.bf16.mxu0 0
  %117 = vmatpush1.bf16.msra.mxu0 0
  %118 = vmatprep.subr.bf16.mxu0 0
  %119 = vmatpush1.bf16.msra.mxu0 0
  %120 = vmatprep.subr.bf16.mxu0 0
  %121 = vmatpush1.bf16.msra.mxu0 0
  %122 = vmatprep.subr.bf16.mxu0 0
  %123 = vmatpush1.bf16.msra.mxu0 0
  %124 = vmatprep.subr.bf16.mxu0 0
  %125 = vmatpush1.bf16.msra.mxu0 0
  %126 = vmatprep.subr.bf16.mxu0 0
  %127 = vmatpush1.bf16.msra.mxu0 0
  %128 = vmatprep.subr.bf16.mxu0 0
  %129 = vmatpush1.bf16.msra.mxu0 0
  %130 = vmatprep.subr.bf16.mxu0 0
  %131 = vmatpush1.bf16.msra.mxu0 0
  %132 = vmatprep.subr.bf16.mxu0 0
  %133 = vmatpush1.bf16.msra.mxu0 0
  %134 = vmatprep.mubr.bf16.mxu0 0
  %135 = vmatmul.mubr.bf16.gmra.mrb[0].mxu0 %v100
  %v136 = vpop.f32.mrb[0].mxu0
  %v137 = vadd.f32 0.0, %v136
  %v138 = vpop.f32.mrb[0].mxu0
  %v139 = vpop.f32.mrb[0].mxu0
  %v140 = vadd.f32 0.0, %v139
  %v141 = vpop.f32.mrb[0].mxu0
  %142 = vdwg.mxu0
  %v151 = vunpack.c.l.b16 %v61
  %v152 = vunpack.c.l.b16 %v62
  %v153 = vunpack.c.l.b16 %v63
  %v154 = vunpack.c.l.b16 %v64
  %v155 = vunpack.c.l.b16 %v65
  %v156 = vunpack.c.l.b16 %v66
  %v157 = vunpack.c.l.b16 %v67
  %v158 = vunpack.c.l.b16 %v68
  %v159 = vpack.c.b16 %v152, %v151
  %v160 = vpack.c.b16 %v154, %v153
  %v161 = vpack.c.b16 %v156, %v155
  %v162 = vpack.c.b16 %v158, %v157
  %167 = vmatprep.subr.bf16.mxu0 0
  %168 = vmatpush1.bf16.msra.mxu0 %v159
  %169 = vmatprep.subr.bf16.mxu0 0
  %170 = vmatpush1.bf16.msra.mxu0 %v160
  %171 = vmatprep.subr.bf16.mxu0 0
  %172 = vmatpush1.bf16.msra.mxu0 %v161
  %173 = vmatprep.subr.bf16.mxu0 0
  %174 = vmatpush1.bf16.msra.mxu0 %v162
  %175 = vmatprep.subr.bf16.mxu0 0
  %176 = vmatpush1.bf16.msra.mxu0 0
  %177 = vmatprep.subr.bf16.mxu0 0
  %178 = vmatpush1.bf16.msra.mxu0 0
  %179 = vmatprep.subr.bf16.mxu0 0
  %180 = vmatpush1.bf16.msra.mxu0 0
  %181 = vmatprep.subr.bf16.mxu0 0
  %182 = vmatpush1.bf16.msra.mxu0 0
  %183 = vmatprep.subr.bf16.mxu0 0
  %184 = vmatpush1.bf16.msra.mxu0 0
  %185 = vmatprep.subr.bf16.mxu0 0
  %186 = vmatpush1.bf16.msra.mxu0 0
  %187 = vmatprep.subr.bf16.mxu0 0
  %188 = vmatpush1.bf16.msra.mxu0 0
  %189 = vmatprep.subr.bf16.mxu0 0
  %190 = vmatpush1.bf16.msra.mxu0 0
  %191 = vmatprep.subr.bf16.mxu0 0
  %192 = vmatpush1.bf16.msra.mxu0 0
  %193 = vmatprep.subr.bf16.mxu0 0
  %194 = vmatpush1.bf16.msra.mxu0 0
  %195 = vmatprep.subr.bf16.mxu0 0
  %196 = vmatpush1.bf16.msra.mxu0 0
  %197 = vmatprep.subr.bf16.mxu0 0
  %198 = vmatpush1.bf16.msra.mxu0 0
  %199 = vmatprep.mubr.bf16.mxu0 0
  %200 = vmatmul.mubr.bf16.gmra.mrb[0].mxu0 %v100
  %v201 = vpop.f32.mrb[0].mxu0
  %v202 = vadd.f32 0.0, %v201
  %v203 = vpop.f32.mrb[0].mxu0
  %v204 = vpop.f32.mrb[0].mxu0
  %v205 = vadd.f32 0.0, %v204
  %v206 = vpop.f32.mrb[0].mxu0
  %207 = vdwg.mxu0
  %vm210 = vcmask 1040384
  %v211 = vrot.slane %v137, 7
  %v212 = vrot.slane %v140, 7
  %v213 = vsel %vm210, %v211, %v212
  %v216 = vsel %vm210, 0.0, %v211
  %v217 = vld [vmem:[%s3] sm:$0xff]
  %v218 = vld [vmem:[%s3 + $0x8] sm:$0xff]
  %220 = vset.pattern.permute.xlu0 0
  %221 = vperm.xlu0 %220, %v217
  %v222 = vpop.permute.xlu0 %221
  %225 = vset.pattern.permute.xlu0 0
  %226 = vperm.xlu0 %225, %v218
  %v227 = vpop.permute.xlu0 %226
  %v229 = vmul.f32 %v216, %v222
  %v230 = vmul.f32 %v213, %v227
  %vm233 = vcmask 1046528
  %v234 = vrot.slane %v202, 1
  %v235 = vrot.slane %v205, 1
  %v236 = vsel %vm233, %v234, %v235
  %v239 = vsel %vm233, %v235, 0.0
  %v240 = vld [vmem:[%s4] sm:$0xff]
  %v241 = vld [vmem:[%s4 + $0x8] sm:$0xff]
  %243 = vset.pattern.permute.xlu0 0
  %244 = vperm.xlu0 %243, %v240
  %v245 = vpop.permute.xlu0 %244
  %248 = vset.pattern.permute.xlu0 0
  %249 = vperm.xlu0 %248, %v241
  %v250 = vpop.permute.xlu0 %249
  %v252 = vmul.f32 %v236, %v245
  %v253 = vmul.f32 %v239, %v250
  %v262 = vunpack.c.l.b16 %v53
  %v263 = vunpack.c.l.b16 %v54
  %v264 = vunpack.c.l.b16 %v55
  %v265 = vunpack.c.l.b16 %v56
  %v266 = vunpack.c.l.b16 %v57
  %v267 = vunpack.c.l.b16 %v58
  %v268 = vunpack.c.l.b16 %v59
  %v269 = vunpack.c.l.b16 %v60
  %v270 = vpack.c.b16 %v263, %v262
  %v271 = vpack.c.b16 %v265, %v264
  %v272 = vpack.c.b16 %v267, %v266
  %v273 = vpack.c.b16 %v269, %v268
  %278 = vmatprep.subr.bf16.mxu0 0
  %279 = vmatpush1.bf16.msra.mxu0 %v270
  %280 = vmatprep.subr.bf16.mxu0 0
  %281 = vmatpush1.bf16.msra.mxu0 %v271
  %282 = vmatprep.subr.bf16.mxu0 0
  %283 = vmatpush1.bf16.msra.mxu0 %v272
  %284 = vmatprep.subr.bf16.mxu0 0
  %285 = vmatpush1.bf16.msra.mxu0 %v273
  %286 = vmatprep.subr.bf16.mxu0 0
  %287 = vmatpush1.bf16.msra.mxu0 0
  %288 = vmatprep.subr.bf16.mxu0 0
  %289 = vmatpush1.bf16.msra.mxu0 0
  %290 = vmatprep.subr.bf16.mxu0 0
  %291 = vmatpush1.bf16.msra.mxu0 0
  %292 = vmatprep.subr.bf16.mxu0 0
  %293 = vmatpush1.bf16.msra.mxu0 0
  %294 = vmatprep.subr.bf16.mxu0 0
  %295 = vmatpush1.bf16.msra.mxu0 0
  %296 = vmatprep.subr.bf16.mxu0 0
  %297 = vmatpush1.bf16.msra.mxu0 0
  %298 = vmatprep.subr.bf16.mxu0 0
  %299 = vmatpush1.bf16.msra.mxu0 0
  %300 = vmatprep.subr.bf16.mxu0 0
  %301 = vmatpush1.bf16.msra.mxu0 0
  %302 = vmatprep.subr.bf16.mxu0 0
  %303 = vmatpush1.bf16.msra.mxu0 0
  %304 = vmatprep.subr.bf16.mxu0 0
  %305 = vmatpush1.bf16.msra.mxu0 0
  %306 = vmatprep.subr.bf16.mxu0 0
  %307 = vmatpush1.bf16.msra.mxu0 0
  %308 = vmatprep.subr.bf16.mxu0 0
  %309 = vmatpush1.bf16.msra.mxu0 0
  %310 = vmatprep.mubr.bf16.mxu0 0
  %311 = vmatmul.mubr.bf16.gmra.mrb[0].mxu0 %v100
  %v312 = vpop.f32.mrb[0].mxu0
  %v313 = vadd.f32 %v229, %v312
  %v314 = vpop.f32.mrb[0].mxu0
  %v315 = vpop.f32.mrb[0].mxu0
  %v316 = vadd.f32 %v230, %v315
  %v317 = vpop.f32.mrb[0].mxu0
  %318 = vdwg.mxu0
  %v319 = vadd.f32 %v313, %v252
  %v320 = vadd.f32 %v316, %v253
  %v321 = vld [vmem:[%s2] sm:$0x1]
  %v323 = vlaneseq
  %v324 = vshrl.u32 %v323, 7
  %v325 = vsub.s32 0, %v324
  %v326 = vrot.slane %v321, %v325
  %v328 = vadd.f32 %v319, %v326
  %v329 = vadd.f32 %v320, %v326
  %vm330 = vcmp.gt.f32.partialorder %v328, 0.0
  %vm331 = vcmp.gt.f32.partialorder %v329, 0.0
  %s332 = sld [smem:[#allocation2]]
  %v333 = vstv %s332
  %v334 = vmul.f32 %v328, %v333
  %v335 = vmul.f32 %v329, %v333
  %v336 = vsel %vm330, %v328, %v334
  %v337 = vsel %vm331, %v329, %v335
  %338 = vst [vmem:[%s6] sm:$0xff] %v336
  %339 = vst [vmem:[%s6 + $0x8] sm:$0xff] %v337
  // Predicated region
  $region26: #{down_block_forward.1} parent=0 // pred_check
    _
  $region27: #{down_block_forward.1} parent=0 // pred_check_branch
    %341 = sbr.rel (0) target = $region29
  $region28: #{down_block_forward.1} parent=0 // pred_region
    _
  $region29: #{down_block_forward.1} parent=0 // pred_fallthru
    _
  // Predicated region
  $region30: #{down_block_forward.1} parent=0 // pred_check
    _
  $region31: #{down_block_forward.1} parent=0 // pred_check_branch
    %343 = sbr.rel (0) target = $region33
  $region32: #{down_block_forward.1} parent=0 // pred_region
    _
  $region33: #{down_block_forward.1} parent=0 // pred_fallthru
    _

</llo_original>
